<compile_context>
chip_gen: v7x
topology: tpu7x:2x2x1
jax: 0.10.0
libtpu: 0.0.40
codegen_flags: <defaults>
</compile_context>

<pallas_src>
import numpy as np
import jax
import jax.numpy as jnp
from jax import lax
from jax.experimental import pallas as pl
from jax.experimental.pallas import tpu as pltpu


def _round_up(x: int, m: int) -> int:
    return ((x + m - 1) // m) * m


# ---------------------------------------------------------------------------
# Pallas kernel: separable 'area' resize, reduce-first
# ---------------------------------------------------------------------------
def _area_resize_kernel(rh_ref, rwt_ref, x_ref, o_ref, y_ref):
    # rh : (H_out, H_in_p)              compute dtype (f32 / bf16)
    # rwt: (W_in*C, WC_out_pad)         compute dtype (kron I_C, transposed, 0-pad)
    # x  : (N_BLK, H_in_p, W_in*C)      input dtype
    # o  : (N_BLK, H_out, WC_out_pad)   input dtype
    # y  : (N_BLK*H_in_p, WC_out_pad)   compute dtype (VMEM scratch)
    n_blk, h_in, wc_in = x_ref.shape
    cdt = rh_ref.dtype

    # 1) Width contraction first: one large weight-stationary MXU matmul over
    #    every image in the block (M = n_blk*H_in_p, stationary RHS = rwt).
    x2 = x_ref[...].astype(cdt).reshape(n_blk * h_in, wc_in)
    y_ref[...] = jnp.dot(
        x2, rwt_ref[...], preferred_element_type=jnp.float32
    ).astype(y_ref.dtype)

    # 2) Per-image height contraction on the (already width-reduced) scratch.
    rh = rh_ref[...]

    def h_body(b, carry):
        row0 = pl.multiple_of(b * h_in, 8)        # H_in_p is a multiple of 8
        yb = y_ref[pl.ds(row0, h_in), :]          # (H_in_p, WC_out_pad)
        zb = jnp.dot(rh, yb, preferred_element_type=jnp.float32)
        o_ref[b] = zb.astype(o_ref.dtype)
        return carry

    lax.fori_loop(0, n_blk, h_body, 0, unroll=True)


# ---------------------------------------------------------------------------
# Glue: VMEM budgeting, block-size choice, pallas_call wrapper
# ---------------------------------------------------------------------------
def _vmem_capacity_bytes(default=64 * 1024 * 1024):
    """Physical VMEM per core; conservative (v7x) fallback if query fails."""
    try:
        return int(pltpu.get_tpu_info().vmem_capacity_bytes)
    except Exception:
        return default


def _choose_n_blk(batch, per_img_bytes, budget_bytes, max_blk=32):
    """Largest divisor of `batch` fitting the budget (capped to bound unroll);
    prefer an even grid count so both v7x TensorCores stay loaded."""
    fit = max(1, int(budget_bytes // max(per_img_bytes, 1)))
    cap = max(1, min(max_blk, fit))
    divisors = [d for d in range(1, batch + 1) if batch % d == 0]
    cands = [d for d in divisors if d <= cap] or [1]
    best = max(cands)
    if (batch // best) % 2 != 0:
        even = [d for d in cands if (batch // d) % 2 == 0 and 2 * d >= best]
        if even:
            best = max(even)
    return best


def pallas_area_resize(x_flat, rh, rwt, out_dtype, n_blk, vmem_limit, cost):
    """x_flat: (B, H_in_p, W_in*C) -> (B, H_out, WC_out_pad) (pad sliced later)."""
    B, h_in, wc_in = x_flat.shape
    h_out = rh.shape[0]
    wc_out = rwt.shape[1]
    grid = B // n_blk
    cdt = rh.dtype
    return pl.pallas_call(
        _area_resize_kernel,
        out_shape=jax.ShapeDtypeStruct((B, h_out, wc_out), out_dtype),
        grid_spec=pltpu.PrefetchScalarGridSpec(
            num_scalar_prefetch=0,
            grid=(grid,),
            in_specs=[
                pl.BlockSpec((h_out, h_in), lambda n: (0, 0)),
                pl.BlockSpec((wc_in, wc_out), lambda n: (0, 0)),
                pl.BlockSpec((n_blk, h_in, wc_in), lambda n: (n, 0, 0)),
            ],
            out_specs=pl.BlockSpec((n_blk, h_out, wc_out), lambda n: (n, 0, 0)),
            scratch_shapes=[pltpu.VMEM((n_blk * h_in, wc_out), cdt)],
        ),
        compiler_params=pltpu.CompilerParams(
            dimension_semantics=("parallel",),
            vmem_limit_bytes=int(vmem_limit),
        ),
        cost_estimate=cost,
    )(rh, rwt, x_flat)


# ---------------------------------------------------------------------------
# Resampling matrices / indices (deterministic, built in glue code)
# ---------------------------------------------------------------------------
def _area_matrix(in_size: int, out_size: int) -> np.ndarray:
    """Rows = adaptive-average-pool windows (F.interpolate mode='area')."""
    mat = np.zeros((out_size, in_size), np.float32)
    for o in range(out_size):
        start = (o * in_size) // out_size
        end = -((-(o + 1) * in_size) // out_size)  # ceil((o+1)*in/out)
        mat[o, start:end] = 1.0 / float(end - start)
    return mat


def _nearest_indices(in_size: int, out_size: int) -> np.ndarray:
    """src index = floor(o * in / out)  (F.interpolate mode='nearest')."""
    return np.array([(o * in_size) // out_size for o in range(out_size)],
                    dtype=np.int32)


# ---------------------------------------------------------------------------
# Module port
# ---------------------------------------------------------------------------
class ResizeShortestEdge:
    def __init__(self, size, channels_last=True,
                 trans_keys=("rgb", "depth", "semantic"),
                 semantic_keys=("semantic",),
                 compute_dtype=jnp.float32):
        self._size = size
        self.channels_last = channels_last
        self.trans_keys = trans_keys
        self.semantic_keys = semantic_keys
        # compute_dtype=jnp.bfloat16 is an opt-in throughput mode (f32 accum
        # kept); default f32 for parity with torch's .float() interpolate.
        self.compute_dtype = jnp.dtype(compute_dtype)

    # --- common geometry -----------------------------------------------------
    def _new_hw(self, h, w):
        scale = self._size / min(h, w)
        return int(h * scale), int(w * scale)

    # --- 'area' path (rgb / depth): Pallas kernel ----------------------------
    def _resize_area(self, obs):
        if obs.ndim < 3 or obs.ndim > 5:
            raise NotImplementedError()
        no_batch = obs.ndim == 3
        img = obs[None] if no_batch else obs

        if self.channels_last:
            h, w, c = img.shape[-3], img.shape[-2], img.shape[-1]
            lead = img.shape[:-3]
        else:
            h, w = img.shape[-2], img.shape[-1]
            c = 1
            lead = img.shape[:-2]

        new_h, new_w = self._new_hw(h, w)
        wc_in, wc_out = w * c, new_w * c
        wc_out_pad = _round_up(wc_out, 128)      # lane-dense output stores
        h_p = _round_up(h, 8)                    # sublane-aligned reshape

        # Resampling matrices: R_h zero-padded on input rows; R_w kron'ed with
        # I_C, transposed, and zero-padded on output columns.
        rh_np = _area_matrix(h, new_h)                               # (new_h, h)
        if h_p != h:
            rh_np = np.pad(rh_np, ((0, 0), (0, h_p - h)))
        rw_np = _area_matrix(w, new_w)                               # (new_w, w)
        if c > 1:
            rwt_np = np.kron(rw_np.T, np.eye(c, dtype=np.float32))   # (w*c, new_w*c)
        else:
            rwt_np = rw_np.T
        if wc_out_pad != wc_out:
            rwt_np = np.pad(rwt_np, ((0, 0), (0, wc_out_pad - wc_out)))
        rh = jnp.asarray(np.ascontiguousarray(rh_np), dtype=self.compute_dtype)
        rwt = jnp.asarray(np.ascontiguousarray(rwt_np), dtype=self.compute_dtype)

        # Channels stay last: folding C into W is a free reshape (no transpose).
        flat = img.reshape((-1, h, wc_in))
        if h_p != h:
            flat = jnp.pad(flat, ((0, 0), (0, h_p - h), (0, 0)))
        batch = flat.shape[0]

        # --- VMEM budgeting (double buffers, resident matrices, f32 temps) ---
        in_item = jnp.dtype(obs.dtype).itemsize
        c_item = self.compute_dtype.itemsize
        cap_bytes = _vmem_capacity_bytes()
        vmem_limit = min((cap_bytes * 3) // 4, 112 * 1024 * 1024)
        fixed = 2 * (new_h * h_p + wc_in * wc_out_pad) * c_item      # rh+rwt (x2 buf)
        per_img = (2 * h_p * wc_in * in_item                         # x block (x2 buf)
                   + 2 * new_h * wc_out_pad * in_item                # out block (x2 buf)
                   + h_p * wc_out_pad * c_item                       # y scratch
                   + h_p * wc_in * c_item                            # cast temp
                   + h_p * wc_out_pad * 4)                           # f32 matmul result
        vmem_limit = max(vmem_limit, min(cap_bytes, fixed + per_img + (4 << 20)))
        budget = vmem_limit - fixed - (2 << 20)
        n_blk = _choose_n_blk(batch, per_img, max(budget, per_img))

        cost = pl.CostEstimate(
            flops=2 * batch * (h_p * wc_in * wc_out_pad + new_h * h_p * wc_out_pad),
            transcendentals=0,
            bytes_accessed=(batch * (h_p * wc_in * in_item
                                     + new_h * wc_out_pad * in_item)
                            + (new_h * h_p + wc_in * wc_out_pad) * c_item),
        )

        res = pallas_area_resize(flat, rh, rwt, obs.dtype, n_blk, vmem_limit, cost)
        res = res[..., :wc_out]                                      # drop lane pad

        if self.channels_last:
            res = res.reshape(lead + (new_h, new_w, c))
        else:
            res = res.reshape(lead + (new_h, new_w))
        if no_batch:
            res = res[0]
        return res

    # --- 'nearest' path (semantic): exact static gather ----------------------
    def _resize_nearest(self, obs):
        if obs.ndim < 3 or obs.ndim > 5:
            raise NotImplementedError()
        nd = obs.ndim
        if self.channels_last:
            h, w = obs.shape[-3], obs.shape[-2]
            h_axis, w_axis = nd - 3, nd - 2
        else:
            h, w = obs.shape[-2], obs.shape[-1]
            h_axis, w_axis = nd - 2, nd - 1
        new_h, new_w = self._new_hw(h, w)
        h_idx = jnp.asarray(_nearest_indices(h, new_h))
        w_idx = jnp.asarray(_nearest_indices(w, new_w))
        res = jnp.take(obs, h_idx, axis=h_axis)
        res = jnp.take(res, w_idx, axis=w_axis)
        return res  # exact: class IDs never leave their integer dtype

    # --- forward --------------------------------------------------------------
    def __call__(self, observations):
        if self._size is None:
            return observations
        out = dict(observations)
        for sensor in self.trans_keys:
            if sensor in out:
                if sensor in self.semantic_keys:
                    out[sensor] = self._resize_nearest(out[sensor])
                else:
                    out[sensor] = self._resize_area(out[sensor])
        return out


# ---------------------------------------------------------------------------
# Demo / check
# ---------------------------------------------------------------------------
def _np_adaptive_avg_pool(img, oh, ow):
    """Independent numpy reference (definition of 'area' interpolation), HWC."""
    H, W = img.shape[:2]
    out = np.zeros((oh, ow) + img.shape[2:], np.float64)
    for i in range(oh):
        hs, he = (i * H) // oh, -((-(i + 1) * H) // oh)
        for j in range(ow):
            ws, we = (j * W) // ow, -((-(j + 1) * W) // ow)
            out[i, j] = img[hs:he, ws:we].mean(axis=(0, 1))
    return out


if __name__ == "__main__":
    key = jax.random.PRNGKey(0)
    k_rgb, k_depth, k_sem, k_rgb2 = jax.random.split(key, 4)

    # Case 1: integer downscale factor (independent reshape-mean reference).
    B, H, W = 2, 16, 24   # shortest edge H=16 -> resize to 8, W -> 12
    rgb = jax.random.uniform(k_rgb, (B, H, W, 3), jnp.float32) * 255.0
    depth = jax.random.uniform(k_depth, (B, H, W, 1), jnp.float32)
    semantic = jax.random.randint(k_sem, (B, H, W, 1), 0, 40, dtype=jnp.int32)

    transformer = ResizeShortestEdge(size=8, channels_last=True)
    out = transformer({"rgb": rgb, "depth": depth, "semantic": semantic})
    jax.block_until_ready(out["rgb"])
    jax.block_until_ready(out["depth"])
    jax.block_until_ready(out["semantic"])

    ref_rgb = rgb.reshape(B, 8, 2, 12, 2, 3).mean(axis=(2, 4))
    assert out["rgb"].shape == (B, 8, 12, 3) and out["rgb"].dtype == jnp.float32
    assert jnp.allclose(out["rgb"], ref_rgb, atol=1e-3, rtol=1e-5)

    ref_depth = depth.reshape(B, 8, 2, 12, 2, 1).mean(axis=(2, 4))
    assert out["depth"].shape == (B, 8, 12, 1)
    assert jnp.allclose(out["depth"], ref_depth, atol=1e-5, rtol=1e-5)

    ref_sem = semantic[:, ::2, ::2, :]
    assert out["semantic"].dtype == jnp.int32
    assert jnp.array_equal(out["semantic"], ref_sem)

    # Case 2: non-integer factor + H padding path (independent numpy reference).
    H2, W2 = 12, 18
    rgb2 = jax.random.uniform(k_rgb2, (B, H2, W2, 3), jnp.float32) * 255.0
    t2 = ResizeShortestEdge(size=8, channels_last=True)
    out2 = t2({"rgb": rgb2})["rgb"]
    jax.block_until_ready(out2)
    nh, nw = t2._new_hw(H2, W2)
    ref2 = np.stack([_np_adaptive_avg_pool(np.asarray(rgb2[b], np.float64), nh, nw)
                     for b in range(B)])
    assert out2.shape == (B, nh, nw, 3) and out2.dtype == jnp.float32
    assert np.allclose(np.asarray(out2, np.float64), ref2, atol=1e-3, rtol=1e-5)

    print("KERNEL_OK")
</pallas_src>

<mosaic_0001>
module attributes {stable_mosaic.version = 11 : i64} {
  func.func @_area_resize_kernel(%arg0: i32, %arg1: memref<8x16xf32, #tpu.memory_space<vmem>>, %arg2: memref<72x128xf32, #tpu.memory_space<vmem>>, %arg3: memref<1x16x72xf32, #tpu.memory_space<vmem>>, %arg4: memref<1x8x128xf32, #tpu.memory_space<vmem>>, %arg5: memref<16x128xf32, #tpu.memory_space<vmem>>) attributes {dimension_semantics = [#tpu.dimension_semantics<parallel>], iteration_bounds = array<i64: 2>, scalar_prefetch = 0 : i64, scratch_operands = 1 : i64, tpu.core_type = #tpu.core_type<tc>, window_params = [{pipeline_mode = #tpu.pipeline_mode<synchronous>, transform_indices = @transform_0, window_bounds = array<i64: 8, 16>}, {pipeline_mode = #tpu.pipeline_mode<synchronous>, transform_indices = @transform_1, window_bounds = array<i64: 72, 128>}, {transform_indices = @transform_2, window_bounds = array<i64: 1, 16, 72>}, {transform_indices = @transform_3, window_bounds = array<i64: 1, 8, 128>}]} {
    %c0 = arith.constant 0 : index
    %c0_0 = arith.constant 0 : index
    %c0_1 = arith.constant 0 : index
    %0 = vector.load %arg3[%c0, %c0_0, %c0_1] : memref<1x16x72xf32, #tpu.memory_space<vmem>>, vector<1x16x72xf32>
    %1 = vector.shape_cast %0 : vector<1x16x72xf32> to vector<16x72xf32>
    %c0_2 = arith.constant 0 : index
    %c0_3 = arith.constant 0 : index
    %2 = vector.load %arg2[%c0_2, %c0_3] : memref<72x128xf32, #tpu.memory_space<vmem>>, vector<72x128xf32>
    %cst = arith.constant dense<0.000000e+00> : vector<16x128xf32>
    %3 = tpu.matmul %1, %2, %cst {dimension_numbers = #tpu.dot_dimension_numbers<[1], [0], [0], [1], [0, 0, 1, 1], [], []>} : vector<16x72xf32>, vector<72x128xf32>, vector<16x128xf32> -> vector<16x128xf32>
    %c0_4 = arith.constant 0 : index
    %c0_5 = arith.constant 0 : index
    %4 = vector.load %arg5[%c0_4, %c0_5] : memref<16x128xf32, #tpu.memory_space<vmem>>, vector<16x128xf32>
    tpu.vector_store %arg5[%c0_4, %c0_5], %3 {strides = array<i32>} : memref<16x128xf32, #tpu.memory_space<vmem>>, vector<16x128xf32>,
    %c0_6 = arith.constant 0 : index
    %c0_7 = arith.constant 0 : index
    %5 = vector.load %arg1[%c0_6, %c0_7] : memref<8x16xf32, #tpu.memory_space<vmem>>, vector<8x16xf32>
    %c0_i32 = arith.constant 0 : i32
    %c16_i32 = arith.constant 16 : i32
    %6 = arith.muli %c0_i32, %c16_i32 : i32
    %7 = tpu.assume_multiple %6, 8 : i32
    %8 = arith.index_cast %7 : i32 to index
    %c0_8 = arith.constant 0 : index
    %9 = vector.load %arg5[%8, %c0_8] : memref<16x128xf32, #tpu.memory_space<vmem>>, vector<16x128xf32>
    %cst_9 = arith.constant dense<0.000000e+00> : vector<8x128xf32>
    %10 = tpu.matmul %5, %9, %cst_9 {dimension_numbers = #tpu.dot_dimension_numbers<[1], [0], [0], [1], [0, 0, 1, 1], [], []>} : vector<8x16xf32>, vector<16x128xf32>, vector<8x128xf32> -> vector<8x128xf32>
    %11 = arith.index_cast %c0_i32 : i32 to index
    %c0_10 = arith.constant 0 : index
    %c0_11 = arith.constant 0 : index
    %12 = vector.load %arg4[%11, %c0_10, %c0_11] : memref<1x8x128xf32, #tpu.memory_space<vmem>>, vector<1x8x128xf32>
    %13 = vector.shape_cast %12 : vector<1x8x128xf32> to vector<8x128xf32>
    %14 = vector.shape_cast %10 : vector<8x128xf32> to vector<1x8x128xf32>
    tpu.vector_store %arg4[%11, %c0_10, %c0_11], %14 {strides = array<i32>} : memref<1x8x128xf32, #tpu.memory_space<vmem>>, vector<1x8x128xf32>,
    %c1_i32 = arith.constant 1 : i32
    return
  }
  func.func @transform_0(%arg0: i32) -> (i32, i32) {
    %c0_i32 = arith.constant 0 : i32
    %c0_i32_0 = arith.constant 0 : i32
    %c0_i32_1 = arith.constant 0 : i32
    return %c0_i32, %c0_i32_0 : i32, i32
  }
  func.func @transform_1(%arg0: i32) -> (i32, i32) {
    %c0_i32 = arith.constant 0 : i32
    %c0_i32_0 = arith.constant 0 : i32
    %c0_i32_1 = arith.constant 0 : i32
    return %c0_i32, %c0_i32_0 : i32, i32
  }
  func.func @transform_2(%arg0: i32) -> (i32, i32, i32) {
    %c0_i32 = arith.constant 0 : i32
    %c0_i32_0 = arith.constant 0 : i32
    %c0_i32_1 = arith.constant 0 : i32
    return %arg0, %c0_i32, %c0_i32_0 : i32, i32, i32
  }
  func.func @transform_3(%arg0: i32) -> (i32, i32, i32) {
    %c0_i32 = arith.constant 0 : i32
    %c0_i32_0 = arith.constant 0 : i32
    %c0_i32_1 = arith.constant 0 : i32
    return %arg0, %c0_i32, %c0_i32_0 : i32, i32, i32
  }
}

</mosaic_0001>

<llo_original>
// kernel: tpu_custom_call.1
$region0: #{tpu_custom_call.1}
  #allocation0 [shape = 'u32[]', space=smem, size = 0x4, offset = 0x4, fixed_abs, tag = 'smem constant byte address 0x4 - core index']
  #allocation1 [shape = 'u32[144,128]{1,0:T(1,128)}', space=vmem, size = 0x12000, scoped, tag = 'internal scratch']
  #allocation2 [shape = 'f32[16,128]{1,0:T(8,128)}', space=vmem, size = 0x2000, scoped, tag = 'scratch operand']
  %s0 = inlined_call_operand.hbm [shape: f32[8,16], index: 0, kind: input, shape index: {}]
  %s1 = inlined_call_operand.hbm [shape: f32[72,128], index: 1, kind: input, shape index: {}]
  %s2 = inlined_call_operand.hbm [shape: f32[2,16,72], index: 2, kind: input, shape index: {}]
  %s3 = inlined_call_operand.hbm [shape: f32[2,8,128], index: 3, kind: output, shape index: {}]
  %s4 = sld [smem:[#allocation0]]
  $region57: #{tpu_custom_call.1} parent=0
    _
  %s6 = ssub.s32 1, %s4
  %s7 = scalar_select 0, %s6, %s4
  $region1: #{tpu_custom_call.1} parent=0
    #allocation3 [shape = 'u8[4096]{0}', space=vmem, size = 0x1000, scoped, tag = 'input window, operand 0, single buffered']
    #allocation4 [shape = 's32[2]{0}', space=sflag, size = 0x8, scoped, tag = 'scoped memory for tpu_custom_call.1']
    #allocation5 [shape = 's32[2]{0}', space=sflag, size = 0x8, scoped, tag = 'scoped memory for tpu_custom_call.1']
    #allocation6 [shape = 'u8[36864]{0}', space=vmem, size = 0x9000, scoped, tag = 'input window, operand 1, single buffered']
    #allocation7 [shape = 's32[1]{0}', space=sflag, size = 0x4, scoped, tag = 'scoped memory for tpu_custom_call.1']
    #allocation8 [shape = 'u8[16384]{0}', space=vmem, size = 0x4000, scoped, tag = 'input window, operand 2']
    #allocation9 [shape = 'u8[8192]{0}', space=vmem, size = 0x2000, scoped, tag = 'output window, operand 0']
    %8 = vsyncpa [#allocation4], 0
    %9 = vsyncpa [#allocation7], 0
    %10 = vsyncpa [#allocation5], 0
    %s11 = scalar_lea.sflag [#allocation5], 1
    %12 = vsyncpa %s11, 0
    loop: start=0, step=1, limit=4
    $region2: #{tpu_custom_call.1} parent=1 // loop_pre_header
      _
    $region3: #{tpu_custom_call.1} parent=1 // loop_header
      %s14 = sphi 0, %s18
      %p15 = scmp.ge.s32.totalorder %s14, 4
      %s22 = sphi 0, %s22
      %s24 = sphi 0, %s22
      %s25 = sphi 0, %s24
      %s39 = sphi 0, %s25
      %s43 = sphi 0, %s43
      %s45 = sphi 0, %s43
      %s46 = sphi 0, %s45
      %s60 = sphi 0, %s46
      %s66 = sphi 0, %s68
      %s69 = sphi 0, %s66
      %s70 = sphi 0, %s69
      %s86 = sphi 0, %s70
      %s92 = sphi 0, %s94
      %s95 = sphi 0, %s92
      %s96 = sphi 0, %s95
      %s112 = sphi 0, %s96
    $region4: #{tpu_custom_call.1} parent=1 // loop_header_branch
      %17 = sbr.rel (%p15) target = $region8
    $region5: #{tpu_custom_call.1} parent=1 // loop_body
      %s19 = ssub.s32 %s14, 1
      %s20 = ssub.s32 %s14, 2
      %s21 = sadd.s32 %s14, 1
      %s23 = sadd.s32 %s22, 1
      %p26 = scmp.eq.s32.totalorder %s14, 1
      %p27 = scmp.ne.s32.totalorder %s22, %s24
      %p28 = scmp.eq.s32.totalorder %s14, 0
      %p29 = por %p27, %p28
      %p30 = scmp.ne.s32.totalorder %s22, %s24
      %p31 = scmp.eq.s32.totalorder %s19, 1
      %p32 = por %p30, %p31
      %p33 = scmp.ne.s32.totalorder %s24, %s25
      %p34 = scmp.eq.s32.totalorder %s19, 0
      %p35 = por %p33, %p34
      %p36 = scmp.ne.s32.totalorder %s24, %s25
      %p37 = scmp.eq.s32.totalorder %s20, 1
      %p38 = por %p36, %p37
      %p40 = scmp.ne.s32.totalorder %s25, %s39
      %p41 = scmp.eq.s32.totalorder %s20, 0
      %p42 = por %p40, %p41
      %s44 = sadd.s32 %s43, 1
      %p47 = scmp.eq.s32.totalorder %s14, 1
      %p48 = scmp.ne.s32.totalorder %s43, %s45
      %p49 = scmp.eq.s32.totalorder %s14, 0
      %p50 = por %p48, %p49
      %p51 = scmp.ne.s32.totalorder %s43, %s45
      %p52 = scmp.eq.s32.totalorder %s19, 1
      %p53 = por %p51, %p52
      %p54 = scmp.ne.s32.totalorder %s45, %s46
      %p55 = scmp.eq.s32.totalorder %s19, 0
      %p56 = por %p54, %p55
      %p57 = scmp.ne.s32.totalorder %s45, %s46
      %p58 = scmp.eq.s32.totalorder %s20, 1
      %p59 = por %p57, %p58
      %p61 = scmp.ne.s32.totalorder %s46, %s60
      %p62 = scmp.eq.s32.totalorder %s20, 0
      %p63 = por %p61, %p62
      %s64 = ssub.s32 %s14, %s21
      %p65 = scmp.eq.s32.totalorder %s64, 0
      %s67 = sadd.s32 %s66, 1
      %s68 = scalar_select %p65, %s66, %s67
      %p71 = pneg %p65
      %p72 = scmp.eq.s32.totalorder %s14, 1
      %p73 = por %p71, %p72
      %p74 = scmp.ne.s32.totalorder %s66, %s69
      %p75 = scmp.eq.s32.totalorder %s14, 0
      %p76 = por %p74, %p75
      %p77 = scmp.ne.s32.totalorder %s66, %s69
      %p78 = scmp.eq.s32.totalorder %s19, 1
      %p79 = por %p77, %p78
      %p80 = scmp.ne.s32.totalorder %s69, %s70
      %p81 = scmp.eq.s32.totalorder %s19, 0
      %p82 = por %p80, %p81
      %p83 = scmp.ne.s32.totalorder %s69, %s70
      %p84 = scmp.eq.s32.totalorder %s20, 1
      %p85 = por %p83, %p84
      %p87 = scmp.ne.s32.totalorder %s70, %s86
      %p88 = scmp.eq.s32.totalorder %s20, 0
      %p89 = por %p87, %p88
      %s90 = ssub.s32 %s14, %s21
      %p91 = scmp.eq.s32.totalorder %s90, 0
      %s93 = sadd.s32 %s92, 1
      %s94 = scalar_select %p91, %s92, %s93
      %p97 = pneg %p91
      %p98 = scmp.eq.s32.totalorder %s14, 1
      %p99 = por %p97, %p98
      %p100 = scmp.ne.s32.totalorder %s92, %s95
      %p101 = scmp.eq.s32.totalorder %s14, 0
      %p102 = por %p100, %p101
      %p103 = scmp.ne.s32.totalorder %s92, %s95
      %p104 = scmp.eq.s32.totalorder %s19, 1
      %p105 = por %p103, %p104
      %p106 = scmp.ne.s32.totalorder %s95, %s96
      %p107 = scmp.eq.s32.totalorder %s19, 0
      %p108 = por %p106, %p107
      %p109 = scmp.ne.s32.totalorder %s95, %s96
      %p110 = scmp.eq.s32.totalorder %s20, 1
      %p111 = por %p109, %p110
      %p113 = scmp.ne.s32.totalorder %s96, %s112
      %p114 = scmp.eq.s32.totalorder %s20, 0
      %p115 = por %p113, %p114
      %p116 = scmp.le.s32.totalorder 1, %s14
      %p117 = scmp.lt.s32.totalorder %s14, 3
      %p118 = pnand %p116, %p117
      %p119 = pneg %p118
      // Predicated region
      $region9: #{tpu_custom_call.1} parent=5 // pred_check
        _
      $region10: #{tpu_custom_call.1} parent=5 // pred_check_branch
        %121 = sbr.rel (%p118) target = $region12
      $region11: #{tpu_custom_call.1} parent=5 // pred_region
        %s122 = ssub.s32 %s14, 1
        // Predicated region
        $region13: #{tpu_custom_call.1} parent=11 // pred_check
          %p123 = pneg %p35
        $region14: #{tpu_custom_call.1} parent=11 // pred_check_branch
          %125 = sbr.rel (%p123) target = $region16
        $region15: #{tpu_custom_call.1} parent=11 // pred_region
          %s127 = ssub.s32 128, 128
          %128 = vsyncadd [#allocation4], %s127
          %s130 = sshll.u32 [#allocation3], 4
          %s131 = int_to_ptr.vmem [resolvable:$true] %s130
          %133 = dma.hbm_to_vmem [thread:$0]  %s0, 128, %s131, [#allocation4]
        $region16: #{tpu_custom_call.1} parent=11 // pred_fallthru
          _
        // Predicated region
        $region17: #{tpu_custom_call.1} parent=11 // pred_check
          %p134 = pneg %p56
        $region18: #{tpu_custom_call.1} parent=11 // pred_check_branch
          %136 = sbr.rel (%p134) target = $region20
        $region19: #{tpu_custom_call.1} parent=11 // pred_region
          %s138 = ssub.s32 1152, 1152
          %139 = vsyncadd [#allocation7], %s138
          %s140 = sshll.u32 [#allocation6], 4
          %s141 = int_to_ptr.vmem [resolvable:$true] %s140
          %146 = dma.hbm_to_vmem [thread:$0]  %s1, 1152, %s141, [#allocation7], 128, 128, 8
        $region20: #{tpu_custom_call.1} parent=11 // pred_fallthru
          _
      $region12: #{tpu_custom_call.1} parent=5 // pred_fallthru
        _
      %p147 = scmp.lt.s32.totalorder %s14, 2
      // Predicated region
      $region21: #{tpu_custom_call.1} parent=5 // pred_check
        %p148 = pneg %p147
      $region22: #{tpu_custom_call.1} parent=5 // pred_check_branch
        %150 = sbr.rel (%p148) target = $region24
      $region23: #{tpu_custom_call.1} parent=5 // pred_region
        // Predicated region
        $region25: #{tpu_custom_call.1} parent=23 // pred_check
          %p151 = pneg %p76
        $region26: #{tpu_custom_call.1} parent=23 // pred_check_branch
          %153 = sbr.rel (%p151) target = $region28
        $region27: #{tpu_custom_call.1} parent=23 // pred_region
          %s154 = sand.u32 %s14, 1
          %s155 = scalar_lea.sflag [#allocation4], %s154
          %s156 = sand.u32 %s66, 1
          %s157 = smul.addr %s156, 16
          %s158 = scalar_lea.vmem [#allocation8], %s157
          %s160 = ssub.s32 256, 256
          %161 = vsyncadd %s155, %s160
          %s162 = smul.addr %s14, 2
          %s163 = smul.addr %s162, 128
          %s164 = scalar_lea.hbm %s2, %s163
          %s165 = sshll.u32 %s158, 4
          %s166 = int_to_ptr.vmem [resolvable:$true] %s165
          %171 = dma.hbm_to_vmem [thread:$0]  %s164, 256, %s166, %s155, 128, 128, 8
        $region28: #{tpu_custom_call.1} parent=23 // pred_fallthru
          _
      $region24: #{tpu_custom_call.1} parent=5 // pred_fallthru
        _
      %p172 = scmp.le.s32.totalorder 1, %s14
      %p173 = scmp.lt.s32.totalorder %s14, 3
      %p174 = pnand %p172, %p173
      %p175 = pneg %p174
      // Predicated region
      $region29: #{tpu_custom_call.1} parent=5 // pred_check
        _
      $region30: #{tpu_custom_call.1} parent=5 // pred_check_branch
        %177 = sbr.rel (%p174) target = $region32
      $region31: #{tpu_custom_call.1} parent=5 // pred_region
        %s178 = ssub.s32 %s14, 1
        // Predicated region
        $region33: #{tpu_custom_call.1} parent=31 // pred_check
          %p179 = pneg %p35
        $region34: #{tpu_custom_call.1} parent=31 // pred_check_branch
          %181 = sbr.rel (%p179) target = $region36
        $region35: #{tpu_custom_call.1} parent=31 // pred_region
          %182 = dma.done [#allocation4], 128
        $region36: #{tpu_custom_call.1} parent=31 // pred_fallthru
          _
        // Predicated region
        $region37: #{tpu_custom_call.1} parent=31 // pred_check
          %p183 = pneg %p56
        $region38: #{tpu_custom_call.1} parent=31 // pred_check_branch
          %185 = sbr.rel (%p183) target = $region40
        $region39: #{tpu_custom_call.1} parent=31 // pred_region
          %186 = dma.done [#allocation7], 1152
        $region40: #{tpu_custom_call.1} parent=31 // pred_fallthru
          _
        %s187 = sand.u32 %s19, 1
        %s188 = scalar_lea.sflag [#allocation4], %s187
        %s189 = sand.u32 %s69, 1
        %s190 = smul.addr %s189, 16
        %s191 = scalar_lea.vmem [#allocation8], %s190
        // Predicated region
        $region41: #{tpu_custom_call.1} parent=31 // pred_check
          %p192 = pneg %p82
        $region42: #{tpu_custom_call.1} parent=31 // pred_check_branch
          %194 = sbr.rel (%p192) target = $region44
        $region43: #{tpu_custom_call.1} parent=31 // pred_region
          %195 = dma.done %s188, 256
        $region44: #{tpu_custom_call.1} parent=31 // pred_fallthru
          _
        %p196 = pneg %p35
        %p197 = pneg %p32
        %p198 = pneg %p56
        %p199 = pneg %p53
        %s200 = sand.u32 %s19, 1
        %s201 = scalar_lea.sflag [#allocation4], %s200
        %s202 = sand.u32 %s69, 1
        %s203 = smul.addr %s202, 16
        %s204 = scalar_lea.vmem [#allocation8], %s203
        %p205 = pneg %p82
        %p206 = pneg %p79
        %p207 = pneg %p108
        %p208 = pneg %p105
        %s209 = sand.u32 %s95, 1
        %s210 = scalar_lea.sflag [#allocation5], %s209
        %s211 = sand.u32 %s95, 1
        %s212 = smul.addr %s211, 8
        %s213 = scalar_lea.vmem [#allocation9], %s212
        %v214 = vld [vmem:[%s191] sm:$0xff]
        %v215 = vld [vmem:[%s191 + $0x8] sm:$0xff]
        %v216 = vld [vmem:[#allocation6] sm:$0xff]
        %v217 = vld [vmem:[#allocation6 + $0x8] sm:$0xff]
        %v218 = vld [vmem:[#allocation6 + $0x10] sm:$0xff]
        %v219 = vld [vmem:[#allocation6 + $0x18] sm:$0xff]
        %v220 = vld [vmem:[#allocation6 + $0x20] sm:$0xff]
        %v221 = vld [vmem:[#allocation6 + $0x28] sm:$0xff]
        %v222 = vld [vmem:[#allocation6 + $0x30] sm:$0xff]
        %v223 = vld [vmem:[#allocation6 + $0x38] sm:$0xff]
        %v224 = vld [vmem:[#allocation6 + $0x40] sm:$0xff]
        %vm225 = vcmask 588800
        %v227 = vsel %vm225, %v214, 0
        %v230 = vsel %vm225, %v215, 0
        %232 = vmatprep.subr.mxu0 0.0
        %233 = vmatpush1.msra.mxu0 %v216
        %234 = vmatprep.subr.mxu0 0.0
        %235 = vmatpush1.msra.mxu0 %v217
        %236 = vmatprep.subr.mxu0 0.0
        %237 = vmatpush1.msra.mxu0 %v218
        %238 = vmatprep.subr.mxu0 0.0
        %239 = vmatpush1.msra.mxu0 %v219
        %240 = vmatprep.subr.mxu0 0.0
        %241 = vmatpush1.msra.mxu0 %v220
        %242 = vmatprep.subr.mxu0 0.0
        %243 = vmatpush1.msra.mxu0 %v221
        %244 = vmatprep.subr.mxu0 0.0
        %245 = vmatpush1.msra.mxu0 %v222
        %246 = vmatprep.subr.mxu0 0.0
        %247 = vmatpush1.msra.mxu0 %v223
        %248 = vmatprep.subr.mxu0 0.0
        %249 = vmatpush1.msra.mxu0 %v224
        %250 = vmatprep.subr.mxu0 0.0
        %251 = vmatpush1.msra.mxu0 0.0
        %252 = vmatprep.subr.mxu0 0.0
        %253 = vmatpush1.msra.mxu0 0.0
        %254 = vmatprep.subr.mxu0 0.0
        %255 = vmatpush1.msra.mxu0 0.0
        %256 = vmatprep.subr.mxu0 0.0
        %257 = vmatpush1.msra.mxu0 0.0
        %258 = vmatprep.subr.mxu0 0.0
        %259 = vmatpush1.msra.mxu0 0.0
        %260 = vmatprep.subr.mxu0 0.0
        %261 = vmatpush1.msra.mxu0 0.0
        %262 = vmatprep.subr.mxu0 0.0
        %263 = vmatpush1.msra.mxu0 0.0
        %264 = vmatprep.subr.mxu0 0.0
        %265 = vmatpush1.msra.mxu0 0.0
        %266 = vmatprep.subr.mxu0 0.0
        %267 = vmatpush1.msra.mxu0 0.0
        %268 = vmatprep.subr.mxu0 0.0
        %269 = vmatpush1.msra.mxu0 0.0
        %270 = vmatprep.subr.mxu0 0.0
        %271 = vmatpush1.msra.mxu0 0.0
        %272 = vmatprep.subr.mxu0 0.0
        %273 = vmatpush1.msra.mxu0 0.0
        %274 = vmatprep.subr.mxu0 0.0
        %275 = vmatpush1.msra.mxu0 0.0
        %276 = vmatprep.subr.mxu0 0.0
        %277 = vmatpush1.msra.mxu0 0.0
        %278 = vmatprep.subr.mxu0 0.0
        %279 = vmatpush1.msra.mxu0 0.0
        %280 = vmatprep.subr.mxu0 0.0
        %281 = vmatpush1.msra.mxu0 0.0
        %282 = vmatprep.subr.mxu0 0.0
        %283 = vmatpush1.msra.mxu0 0.0
        %284 = vmatprep.subr.mxu0 0.0
        %285 = vmatpush1.msra.mxu0 0.0
        %286 = vmatprep.subr.mxu0 0.0
        %287 = vmatpush1.msra.mxu0 0.0
        %288 = vmatprep.subr.mxu0 0.0
        %289 = vmatpush1.msra.mxu0 0.0
        %290 = vmatprep.subr.mxu0 0.0
        %291 = vmatpush1.msra.mxu0 0.0
        %292 = vmatprep.subr.mxu0 0.0
        %293 = vmatpush1.msra.mxu0 0.0
        %294 = vmatprep.subr.mxu0 0.0
        %295 = vmatpush1.msra.mxu0 0.0
        %296 = vmatprep.mubr.f32.mxu0 0.0
        %297 = vmatmul.mubr.f32.gmra.mrb[0].mxu0 %v227
        %v298 = vpop.f32.mrb[0].mxu0
        %v299 = vadd.f32 0.0, %v298
        %v300 = vpop.f32.mrb[0].mxu0
        %301 = vmatprep.mubr.f32.mxu0 0.0
        %302 = vmatmul.mubr.f32.gmra.mrb[0].mxu0 %v230
        %v303 = vpop.f32.mrb[0].mxu0
        %v304 = vadd.f32 0.0, %v303
        %v305 = vpop.f32.mrb[0].mxu0
        %306 = vdwg.mxu0
        %307 = vst [vmem:[#allocation2] sm:$0xff] %v299
        %308 = vst [vmem:[#allocation2 + $0x8] sm:$0xff] %v304
        %v309 = vld [vmem:[#allocation3] sm:$0xff]
        %v310 = vld [vmem:[#allocation2] sm:$0xff]
        %v311 = vld [vmem:[#allocation2 + $0x8] sm:$0xff]
        %vm312 = vcmask 130048
        %v314 = vsel %vm312, %v309, 0
        %316 = vmatprep.subr.mxu0 0.0
        %317 = vmatpush1.msra.mxu0 %v310
        %318 = vmatprep.subr.mxu0 0.0
        %319 = vmatpush1.msra.mxu0 %v311
        %320 = vmatprep.subr.mxu0 0.0
        %321 = vmatpush1.msra.mxu0 0.0
        %322 = vmatprep.subr.mxu0 0.0
        %323 = vmatpush1.msra.mxu0 0.0
        %324 = vmatprep.subr.mxu0 0.0
        %325 = vmatpush1.msra.mxu0 0.0
        %326 = vmatprep.subr.mxu0 0.0
        %327 = vmatpush1.msra.mxu0 0.0
        %328 = vmatprep.subr.mxu0 0.0
        %329 = vmatpush1.msra.mxu0 0.0
        %330 = vmatprep.subr.mxu0 0.0
        %331 = vmatpush1.msra.mxu0 0.0
        %332 = vmatprep.subr.mxu0 0.0
        %333 = vmatpush1.msra.mxu0 0.0
        %334 = vmatprep.subr.mxu0 0.0
        %335 = vmatpush1.msra.mxu0 0.0
        %336 = vmatprep.subr.mxu0 0.0
        %337 = vmatpush1.msra.mxu0 0.0
        %338 = vmatprep.subr.mxu0 0.0
        %339 = vmatpush1.msra.mxu0 0.0
        %340 = vmatprep.subr.mxu0 0.0
        %341 = vmatpush1.msra.mxu0 0.0
        %342 = vmatprep.subr.mxu0 0.0
        %343 = vmatpush1.msra.mxu0 0.0
        %344 = vmatprep.subr.mxu0 0.0
        %345 = vmatpush1.msra.mxu0 0.0
        %346 = vmatprep.subr.mxu0 0.0
        %347 = vmatpush1.msra.mxu0 0.0
        %348 = vmatprep.subr.mxu0 0.0
        %349 = vmatpush1.msra.mxu0 0.0
        %350 = vmatprep.subr.mxu0 0.0
        %351 = vmatpush1.msra.mxu0 0.0
        %352 = vmatprep.subr.mxu0 0.0
        %353 = vmatpush1.msra.mxu0 0.0
        %354 = vmatprep.subr.mxu0 0.0
        %355 = vmatpush1.msra.mxu0 0.0
        %356 = vmatprep.subr.mxu0 0.0
        %357 = vmatpush1.msra.mxu0 0.0
        %358 = vmatprep.subr.mxu0 0.0
        %359 = vmatpush1.msra.mxu0 0.0
        %360 = vmatprep.subr.mxu0 0.0
        %361 = vmatpush1.msra.mxu0 0.0
        %362 = vmatprep.subr.mxu0 0.0
        %363 = vmatpush1.msra.mxu0 0.0
        %364 = vmatprep.subr.mxu0 0.0
        %365 = vmatpush1.msra.mxu0 0.0
        %366 = vmatprep.subr.mxu0 0.0
        %367 = vmatpush1.msra.mxu0 0.0
        %368 = vmatprep.subr.mxu0 0.0
        %369 = vmatpush1.msra.mxu0 0.0
        %370 = vmatprep.subr.mxu0 0.0
        %371 = vmatpush1.msra.mxu0 0.0
        %372 = vmatprep.subr.mxu0 0.0
        %373 = vmatpush1.msra.mxu0 0.0
        %374 = vmatprep.subr.mxu0 0.0
        %375 = vmatpush1.msra.mxu0 0.0
        %376 = vmatprep.subr.mxu0 0.0
        %377 = vmatpush1.msra.mxu0 0.0
        %378 = vmatprep.subr.mxu0 0.0
        %379 = vmatpush1.msra.mxu0 0.0
        %380 = vmatprep.mubr.f32.mxu0 0.0
        %381 = vmatmul.mubr.f32.gmra.mrb[0].mxu0 %v314
        %v382 = vpop.f32.mrb[0].mxu0
        %v383 = vadd.f32 0.0, %v382
        %v384 = vpop.f32.mrb[0].mxu0
        %385 = vdwg.mxu0
        %386 = vst [vmem:[%s213] sm:$0xff] %v383
        %s387 = sand.u32 %s95, 1
        %s388 = scalar_lea.sflag [#allocation5], %s387
        %s389 = sand.u32 %s95, 1
        %s390 = smul.addr %s389, 8
        %s391 = scalar_lea.vmem [#allocation9], %s390
        // Predicated region
        $region45: #{tpu_custom_call.1} parent=31 // pred_check
          %p392 = pneg %p105
        $region46: #{tpu_custom_call.1} parent=31 // pred_check_branch
          %394 = sbr.rel (%p392) target = $region48
        $region47: #{tpu_custom_call.1} parent=31 // pred_region
          %s396 = ssub.s32 128, 128
          %397 = vsyncadd %s388, %s396
          %s398 = smul.addr %s19, 128
          %s399 = scalar_lea.hbm %s3, %s398
          %s401 = sshll.u32 %s391, 4
          %s402 = int_to_ptr.vmem [resolvable:$true] %s401
          %404 = dma.vmem_to_hbm [thread:$0]  %s402, 128, %s399, %s388
        $region48: #{tpu_custom_call.1} parent=31 // pred_fallthru
          _
      $region32: #{tpu_custom_call.1} parent=5 // pred_fallthru
        _
      %p405 = scmp.le.s32.totalorder 2, %s14
      // Predicated region
      $region49: #{tpu_custom_call.1} parent=5 // pred_check
        %p406 = pneg %p405
      $region50: #{tpu_custom_call.1} parent=5 // pred_check_branch
        %408 = sbr.rel (%p406) target = $region52
      $region51: #{tpu_custom_call.1} parent=5 // pred_region
        %s409 = ssub.s32 %s14, 2
        // Predicated region
        $region53: #{tpu_custom_call.1} parent=51 // pred_check
          %p410 = pneg %p111
        $region54: #{tpu_custom_call.1} parent=51 // pred_check_branch
          %412 = sbr.rel (%p410) target = $region56
        $region55: #{tpu_custom_call.1} parent=51 // pred_region
          %s413 = sand.u32 %s96, 1
          %s414 = scalar_lea.sflag [#allocation5], %s413
          %s415 = sand.u32 %s96, 1
          %s416 = smul.addr %s415, 8
          %s417 = scalar_lea.vmem [#allocation9], %s416
          %418 = dma.done %s414, 128
        $region56: #{tpu_custom_call.1} parent=51 // pred_fallthru
          _
      $region52: #{tpu_custom_call.1} parent=5 // pred_fallthru
        _
    $region6: #{tpu_custom_call.1} parent=1 // loop_footer
      %s18 = sadd.s32 1, %s14
    $region7: #{tpu_custom_call.1} parent=1 // loop_footer_branch
      %13 = sbr.rel target = $region3
    $region8: #{tpu_custom_call.1} parent=1 // loop_exit
      _
    %419 = vsyncpa [#allocation4], 1
    %s420 = scalar_lea.sflag [#allocation4], 1
    %421 = vsyncpa %s420, 1
    %422 = vsyncpa [#allocation7], 1
    %423 = vsyncpa [#allocation5], 1
    %s424 = scalar_lea.sflag [#allocation5], 1
    %425 = vsyncpa %s424, 1

</llo_original>
